<compile_context>
chip_gen: v7x
topology: tpu7x:2x2x1
jax: 0.10.0
libtpu: 0.0.40
codegen_flags: <defaults>
</compile_context>

<pallas_src>
import functools

import jax
import jax.numpy as jnp
from jax import lax
from jax.experimental import pallas as pl
from jax.experimental.pallas import tpu as pltpu


# ----------------------------------------------------------------------------
# Fused kernel: the whole Res2Net scale-conv chain for one batch image.
#   x_ref  : (1, scale, width, H*W) f32   input, channel chunks on a leading axis
#   w_ref  : (num_conv, width, 9*width)   bf16 tap-stacked weights (cols t*Cin:(t+1)*Cin = tap t)
#   b_ref  : (num_conv, width, 1) f32     biases (lane-broadcastable)
#   o_ref  : (1, scale, width, H*W)       output (channel concat == same chunk layout)
#   stk_ref: (9*width, H*W) f32 VMEM      scratch for the tap-stacked activation
# ----------------------------------------------------------------------------
def _res2net_scale_conv_kernel(x_ref, w_ref, b_ref, o_ref, stk_ref, *,
                               scale, width, H, W):
    HW = H * W
    num_conv = max(1, scale - 1)
    f32 = jnp.float32

    # --- lane -> (row, col) decode + per-tap halo masks (hoisted, built once) ---------
    p = lax.broadcasted_iota(jnp.int32, (width, HW), 1)
    if (W & (W - 1)) == 0:                      # power-of-two fast path (no int div/mod)
        col = jnp.bitwise_and(p, W - 1)
        row = jnp.right_shift(p, int(W).bit_length() - 1)
    else:                                       # generic fallback (slow VPU div/mod)
        col = p % W
        row = p // W

    taps = []                                   # (tap_idx, lane_offset, 0/1 f32 mask | None)
    for oh in (-1, 0, 1):
        for ow in (-1, 0, 1):
            conds = []
            if oh == -1:
                conds.append(row >= 1)
            if oh == 1:
                conds.append(row <= H - 2)
            if ow == -1:
                conds.append(col >= 1)
            if ow == 1:
                conds.append(col <= W - 2)
            mask = None
            for c in conds:
                mask = c if mask is None else jnp.logical_and(mask, c)
            mask_f = None if mask is None else mask.astype(f32)
            taps.append(((oh + 1) * 3 + (ow + 1), oh * W + ow, mask_f))

    # --- hierarchical branch chain (out[i-1] stays in vregs between branches) ---------
    prev = None
    for i in range(num_conv):
        xi = x_ref[0, i, :, :]                              # (width, HW) f32, full-slab read
        act = xi if prev is None else prev + xi             # Res2Net residual add (f32)

        # Tap-stacked activation: rows [t*width:(t+1)*width] = tap t of `act`, lane-rolled
        # by the tap offset and zeroed on the halo (== conv padding=1 semantics).
        for (t, off, mask_f) in taps:
            win = act if off == 0 else pltpu.roll(act, shift=(-off) % HW, axis=1)
            if mask_f is not None:
                win = win * mask_f
            stk_ref[t * width:(t + 1) * width, :] = win

        # One MXU dot per branch: (width, 9*width) @ (9*width, HW); bf16 in, f32 acc.
        acc = jnp.dot(w_ref[i, :, :],
                      stk_ref[...].astype(jnp.bfloat16),
                      preferred_element_type=f32)           # (width, HW) f32
        out_i = acc + b_ref[i, :, :]                        # (width,1) lane-broadcast bias
        o_ref[0, i, :, :] = out_i.astype(o_ref.dtype)       # full-slab, tile-aligned store
        prev = out_i

    if scale > 1:                                           # identity pass-through chunk
        o_ref[0, scale - 1, :, :] = x_ref[0, scale - 1, :, :].astype(o_ref.dtype)


# ----------------------------------------------------------------------------
# Wrapper: free reshape to (N, scale, width, H*W), one fused pallas_call over the batch.
# ----------------------------------------------------------------------------
def scale_conv2d(x_nchw, w_stack, b_stack, *, scale, width):
    N, C, H, W = x_nchw.shape
    assert C == scale * width
    HW = H * W
    num_conv = max(1, scale - 1)
    x_split = x_nchw.reshape(N, scale, width, HW)   # contiguous NCHW -> free reshape

    kernel = functools.partial(_res2net_scale_conv_kernel,
                               scale=scale, width=width, H=H, W=W)
    out = pl.pallas_call(
        kernel,
        out_shape=jax.ShapeDtypeStruct((N, scale, width, HW), x_nchw.dtype),
        grid=(N,),
        in_specs=[
            pl.BlockSpec((1, scale, width, HW), lambda n: (n, 0, 0, 0)),
            pl.BlockSpec((num_conv, width, 9 * width), lambda n: (0, 0, 0)),
            pl.BlockSpec((num_conv, width, 1), lambda n: (0, 0, 0)),
        ],
        out_specs=pl.BlockSpec((1, scale, width, HW), lambda n: (n, 0, 0, 0)),
        scratch_shapes=[pltpu.VMEM((9 * width, HW), jnp.float32)],
        compiler_params=pltpu.CompilerParams(
            dimension_semantics=("parallel",)),
    )(x_split, w_stack, b_stack)
    return out.reshape(N, C, H, W)


def stack_params(weights, biases, width):
    """HWIO (3,3,Cin,Cout) weights -> tap-stacked (num_conv, Cout, 9*Cin) bf16;
       biases -> (num_conv, Cout, 1) f32."""
    w = jnp.stack(
        [jnp.transpose(wi, (3, 0, 1, 2)).reshape(width, 9 * width) for wi in weights],
        axis=0).astype(jnp.bfloat16)
    b = jnp.stack(biases, 0).astype(jnp.float32).reshape(len(biases), width, 1)
    return w, b


# ----------------------------------------------------------------------------
# Pure-JAX reference (lax.conv, f32) for correctness checking
# ----------------------------------------------------------------------------
def scale_conv2d_ref(x_nchw, weights, biases, scale, width):
    x = jnp.transpose(x_nchw, (0, 2, 3, 1))
    splits = [x[..., i * width:(i + 1) * width] for i in range(scale)]
    num_conv = max(1, scale - 1)
    outs = []
    for i in range(num_conv):
        res = splits[i] if i == 0 else outs[-1] + splits[i]
        y = lax.conv_general_dilated(
            res, weights[i], (1, 1), ((1, 1), (1, 1)),
            dimension_numbers=("NHWC", "HWIO", "NHWC"),
        ) + biases[i]
        outs.append(y)
    if scale > 1:
        outs.append(splits[-1])
    return jnp.transpose(jnp.concatenate(outs, -1), (0, 3, 1, 2))


# ----------------------------------------------------------------------------
# Deterministic parameter init (mimics torch Conv2d default kaiming-uniform)
# ----------------------------------------------------------------------------
def init_params(key, scale, width):
    num_conv = max(1, scale - 1)
    fan_in = width * 3 * 3
    bound = 1.0 / jnp.sqrt(fan_in)
    weights, biases = [], []
    for _ in range(num_conv):
        key, kw, kb = jax.random.split(key, 3)
        w = jax.random.uniform(kw, (3, 3, width, width), jnp.float32,
                               -bound, bound)                 # HWIO
        b = jax.random.uniform(kb, (width,), jnp.float32, -bound, bound)
        weights.append(w)
        biases.append(b)
    return weights, biases


if __name__ == "__main__":
    SCALE = 4
    PLANES = 16
    WIDTH = PLANES // SCALE          # 4
    N, H, W = 2, 16, 16

    key = jax.random.PRNGKey(0)
    key, kx = jax.random.split(key)
    x = jax.random.normal(kx, (N, PLANES, H, W), jnp.float32)   # NCHW input

    weights, biases = init_params(key, SCALE, WIDTH)
    w_stack, b_stack = stack_params(weights, biases, WIDTH)

    fwd = jax.jit(functools.partial(scale_conv2d, scale=SCALE, width=WIDTH))
    out = jax.block_until_ready(fwd(x, w_stack, b_stack))

    ref = scale_conv2d_ref(x, weights, biases, SCALE, WIDTH)
    assert out.shape == (N, PLANES, H, W), out.shape
    max_err = float(jnp.max(jnp.abs(out - ref)))
    # bf16 MXU inputs -> expected quantization error ~1e-2 (review note), not a bug.
    assert jnp.allclose(out, ref, atol=3e-2, rtol=3e-2), max_err
    print("KERNEL_OK")
</pallas_src>

<mosaic_0001>
module attributes {stable_mosaic.version = 11 : i64} {
  func.func @_res2net_scale_conv_kernel(%arg0: i32, %arg1: memref<1x4x4x256xf32, #tpu.memory_space<vmem>>, %arg2: memref<3x4x36xbf16, #tpu.memory_space<vmem>>, %arg3: memref<3x4x1xf32, #tpu.memory_space<vmem>>, %arg4: memref<1x4x4x256xf32, #tpu.memory_space<vmem>>, %arg5: memref<36x256xf32, #tpu.memory_space<vmem>>) attributes {dimension_semantics = [#tpu.dimension_semantics<parallel>], iteration_bounds = array<i64: 2>, scalar_prefetch = 0 : i64, scratch_operands = 1 : i64, tpu.core_type = #tpu.core_type<tc>, window_params = [{transform_indices = @transform_0, window_bounds = array<i64: 1, 4, 4, 256>}, {pipeline_mode = #tpu.pipeline_mode<synchronous>, transform_indices = @transform_1, window_bounds = array<i64: 3, 4, 36>}, {pipeline_mode = #tpu.pipeline_mode<synchronous>, transform_indices = @transform_2, window_bounds = array<i64: 3, 4, 1>}, {transform_indices = @transform_3, window_bounds = array<i64: 1, 4, 4, 256>}]} {
    %0 = tpu.iota {dimensions = array<i32: 1>} : vector<4x256xi32>
    %c15_i32 = arith.constant 15 : i32
    %1 = vector.broadcast %c15_i32 : i32 to vector<4x256xi32>
    %2 = arith.andi %0, %1 : vector<4x256xi32>
    %c4_i32 = arith.constant 4 : i32
    %3 = vector.broadcast %c4_i32 : i32 to vector<4x256xi32>
    %4 = arith.shrsi %0, %3 : vector<4x256xi32>
    %c1_i32 = arith.constant 1 : i32
    %5 = vector.broadcast %c1_i32 : i32 to vector<4x256xi32>
    %6 = arith.cmpi sge, %4, %5 : vector<4x256xi32>
    %c1_i32_0 = arith.constant 1 : i32
    %7 = vector.broadcast %c1_i32_0 : i32 to vector<4x256xi32>
    %8 = arith.cmpi sge, %2, %7 : vector<4x256xi32>
    %9 = arith.andi %6, %8 : vector<4x256xi1>
    %10 = arith.extui %9 : vector<4x256xi1> to vector<4x256xi32>
    %11 = arith.sitofp %10 : vector<4x256xi32> to vector<4x256xf32>
    %c1_i32_1 = arith.constant 1 : i32
    %12 = vector.broadcast %c1_i32_1 : i32 to vector<4x256xi32>
    %13 = arith.cmpi sge, %4, %12 : vector<4x256xi32>
    %14 = arith.extui %13 : vector<4x256xi1> to vector<4x256xi32>
    %15 = arith.sitofp %14 : vector<4x256xi32> to vector<4x256xf32>
    %c1_i32_2 = arith.constant 1 : i32
    %16 = vector.broadcast %c1_i32_2 : i32 to vector<4x256xi32>
    %17 = arith.cmpi sge, %4, %16 : vector<4x256xi32>
    %c14_i32 = arith.constant 14 : i32
    %18 = vector.broadcast %c14_i32 : i32 to vector<4x256xi32>
    %19 = arith.cmpi sle, %2, %18 : vector<4x256xi32>
    %20 = arith.andi %17, %19 : vector<4x256xi1>
    %21 = arith.extui %20 : vector<4x256xi1> to vector<4x256xi32>
    %22 = arith.sitofp %21 : vector<4x256xi32> to vector<4x256xf32>
    %c1_i32_3 = arith.constant 1 : i32
    %23 = vector.broadcast %c1_i32_3 : i32 to vector<4x256xi32>
    %24 = arith.cmpi sge, %2, %23 : vector<4x256xi32>
    %25 = arith.extui %24 : vector<4x256xi1> to vector<4x256xi32>
    %26 = arith.sitofp %25 : vector<4x256xi32> to vector<4x256xf32>
    %c14_i32_4 = arith.constant 14 : i32
    %27 = vector.broadcast %c14_i32_4 : i32 to vector<4x256xi32>
    %28 = arith.cmpi sle, %2, %27 : vector<4x256xi32>
    %29 = arith.extui %28 : vector<4x256xi1> to vector<4x256xi32>
    %30 = arith.sitofp %29 : vector<4x256xi32> to vector<4x256xf32>
    %c14_i32_5 = arith.constant 14 : i32
    %31 = vector.broadcast %c14_i32_5 : i32 to vector<4x256xi32>
    %32 = arith.cmpi sle, %4, %31 : vector<4x256xi32>
    %c1_i32_6 = arith.constant 1 : i32
    %33 = vector.broadcast %c1_i32_6 : i32 to vector<4x256xi32>
    %34 = arith.cmpi sge, %2, %33 : vector<4x256xi32>
    %35 = arith.andi %32, %34 : vector<4x256xi1>
    %36 = arith.extui %35 : vector<4x256xi1> to vector<4x256xi32>
    %37 = arith.sitofp %36 : vector<4x256xi32> to vector<4x256xf32>
    %c14_i32_7 = arith.constant 14 : i32
    %38 = vector.broadcast %c14_i32_7 : i32 to vector<4x256xi32>
    %39 = arith.cmpi sle, %4, %38 : vector<4x256xi32>
    %40 = arith.extui %39 : vector<4x256xi1> to vector<4x256xi32>
    %41 = arith.sitofp %40 : vector<4x256xi32> to vector<4x256xf32>
    %c14_i32_8 = arith.constant 14 : i32
    %42 = vector.broadcast %c14_i32_8 : i32 to vector<4x256xi32>
    %43 = arith.cmpi sle, %4, %42 : vector<4x256xi32>
    %c14_i32_9 = arith.constant 14 : i32
    %44 = vector.broadcast %c14_i32_9 : i32 to vector<4x256xi32>
    %45 = arith.cmpi sle, %2, %44 : vector<4x256xi32>
    %46 = arith.andi %43, %45 : vector<4x256xi1>
    %47 = arith.extui %46 : vector<4x256xi1> to vector<4x256xi32>
    %48 = arith.sitofp %47 : vector<4x256xi32> to vector<4x256xf32>
    %c0 = arith.constant 0 : index
    %c0_10 = arith.constant 0 : index
    %c0_11 = arith.constant 0 : index
    %c0_12 = arith.constant 0 : index
    %49 = vector.load %arg1[%c0, %c0_10, %c0_11, %c0_12] : memref<1x4x4x256xf32, #tpu.memory_space<vmem>>, vector<1x1x4x256xf32>
    %50 = vector.shape_cast %49 : vector<1x1x4x256xf32> to vector<4x256xf32>
    %c17_i32 = arith.constant 17 : i32
    %51 = tpu.dynamic_rotate %50 by %c17_i32 dim 1 : vector<4x256xf32>, i32 -> vector<4x256xf32>
    %52 = arith.mulf %51, %11 : vector<4x256xf32>
    %c0_13 = arith.constant 0 : index
    %c0_14 = arith.constant 0 : index
    %53 = vector.load %arg5[%c0_13, %c0_14] : memref<36x256xf32, #tpu.memory_space<vmem>>, vector<4x256xf32>
    tpu.vector_store %arg5[%c0_13, %c0_14], %52 {strides = array<i32>} : memref<36x256xf32, #tpu.memory_space<vmem>>, vector<4x256xf32>,
    %c16_i32 = arith.constant 16 : i32
    %54 = tpu.dynamic_rotate %50 by %c16_i32 dim 1 : vector<4x256xf32>, i32 -> vector<4x256xf32>
    %55 = arith.mulf %54, %15 : vector<4x256xf32>
    %c4 = arith.constant 4 : index
    %c0_15 = arith.constant 0 : index
    %56 = vector.load %arg5[%c4, %c0_15] : memref<36x256xf32, #tpu.memory_space<vmem>>, vector<4x256xf32>
    tpu.vector_store %arg5[%c4, %c0_15], %55 {strides = array<i32>} : memref<36x256xf32, #tpu.memory_space<vmem>>, vector<4x256xf32>,
    %c15_i32_16 = arith.constant 15 : i32
    %57 = tpu.dynamic_rotate %50 by %c15_i32_16 dim 1 : vector<4x256xf32>, i32 -> vector<4x256xf32>
    %58 = arith.mulf %57, %22 : vector<4x256xf32>
    %c8 = arith.constant 8 : index
    %c0_17 = arith.constant 0 : index
    %59 = vector.load %arg5[%c8, %c0_17] : memref<36x256xf32, #tpu.memory_space<vmem>>, vector<4x256xf32>
    tpu.vector_store %arg5[%c8, %c0_17], %58 {strides = array<i32>} : memref<36x256xf32, #tpu.memory_space<vmem>>, vector<4x256xf32>,
    %c1_i32_18 = arith.constant 1 : i32
    %60 = tpu.dynamic_rotate %50 by %c1_i32_18 dim 1 : vector<4x256xf32>, i32 -> vector<4x256xf32>
    %61 = arith.mulf %60, %26 : vector<4x256xf32>
    %c12 = arith.constant 12 : index
    %c0_19 = arith.constant 0 : index
    %62 = vector.load %arg5[%c12, %c0_19] : memref<36x256xf32, #tpu.memory_space<vmem>>, vector<4x256xf32>
    tpu.vector_store %arg5[%c12, %c0_19], %61 {strides = array<i32>} : memref<36x256xf32, #tpu.memory_space<vmem>>, vector<4x256xf32>,
    %c16 = arith.constant 16 : index
    %c0_20 = arith.constant 0 : index
    %63 = vector.load %arg5[%c16, %c0_20] : memref<36x256xf32, #tpu.memory_space<vmem>>, vector<4x256xf32>
    tpu.vector_store %arg5[%c16, %c0_20], %50 {strides = array<i32>} : memref<36x256xf32, #tpu.memory_space<vmem>>, vector<4x256xf32>,
    %c255_i32 = arith.constant 255 : i32
    %64 = tpu.dynamic_rotate %50 by %c255_i32 dim 1 : vector<4x256xf32>, i32 -> vector<4x256xf32>
    %65 = arith.mulf %64, %30 : vector<4x256xf32>
    %c20 = arith.constant 20 : index
    %c0_21 = arith.constant 0 : index
    %66 = vector.load %arg5[%c20, %c0_21] : memref<36x256xf32, #tpu.memory_space<vmem>>, vector<4x256xf32>
    tpu.vector_store %arg5[%c20, %c0_21], %65 {strides = array<i32>} : memref<36x256xf32, #tpu.memory_space<vmem>>, vector<4x256xf32>,
    %c241_i32 = arith.constant 241 : i32
    %67 = tpu.dynamic_rotate %50 by %c241_i32 dim 1 : vector<4x256xf32>, i32 -> vector<4x256xf32>
    %68 = arith.mulf %67, %37 : vector<4x256xf32>
    %c24 = arith.constant 24 : index
    %c0_22 = arith.constant 0 : index
    %69 = vector.load %arg5[%c24, %c0_22] : memref<36x256xf32, #tpu.memory_space<vmem>>, vector<4x256xf32>
    tpu.vector_store %arg5[%c24, %c0_22], %68 {strides = array<i32>} : memref<36x256xf32, #tpu.memory_space<vmem>>, vector<4x256xf32>,
    %c240_i32 = arith.constant 240 : i32
    %70 = tpu.dynamic_rotate %50 by %c240_i32 dim 1 : vector<4x256xf32>, i32 -> vector<4x256xf32>
    %71 = arith.mulf %70, %41 : vector<4x256xf32>
    %c28 = arith.constant 28 : index
    %c0_23 = arith.constant 0 : index
    %72 = vector.load %arg5[%c28, %c0_23] : memref<36x256xf32, #tpu.memory_space<vmem>>, vector<4x256xf32>
    tpu.vector_store %arg5[%c28, %c0_23], %71 {strides = array<i32>} : memref<36x256xf32, #tpu.memory_space<vmem>>, vector<4x256xf32>,
    %c239_i32 = arith.constant 239 : i32
    %73 = tpu.dynamic_rotate %50 by %c239_i32 dim 1 : vector<4x256xf32>, i32 -> vector<4x256xf32>
    %74 = arith.mulf %73, %48 : vector<4x256xf32>
    %c32 = arith.constant 32 : index
    %c0_24 = arith.constant 0 : index
    %75 = vector.load %arg5[%c32, %c0_24] : memref<36x256xf32, #tpu.memory_space<vmem>>, vector<4x256xf32>
    tpu.vector_store %arg5[%c32, %c0_24], %74 {strides = array<i32>} : memref<36x256xf32, #tpu.memory_space<vmem>>, vector<4x256xf32>,
    %c0_25 = arith.constant 0 : index
    %c0_26 = arith.constant 0 : index
    %c0_27 = arith.constant 0 : index
    %76 = vector.load %arg2[%c0_25, %c0_26, %c0_27] : memref<3x4x36xbf16, #tpu.memory_space<vmem>>, vector<1x4x36xbf16>
    %77 = vector.shape_cast %76 : vector<1x4x36xbf16> to vector<4x36xbf16>
    %c0_28 = arith.constant 0 : index
    %c0_29 = arith.constant 0 : index
    %78 = vector.load %arg5[%c0_28, %c0_29] : memref<36x256xf32, #tpu.memory_space<vmem>>, vector<36x256xf32>
    %79 = arith.truncf %78 : vector<36x256xf32> to vector<36x256xbf16>
    %cst = arith.constant dense<0.000000e+00> : vector<4x256xf32>
    %80 = tpu.matmul %77, %79, %cst {dimension_numbers = #tpu.dot_dimension_numbers<[1], [0], [0], [1], [0, 0, 1, 1], [], []>} : vector<4x36xbf16>, vector<36x256xbf16>, vector<4x256xf32> -> vector<4x256xf32>
    %c0_30 = arith.constant 0 : index
    %c0_31 = arith.constant 0 : index
    %c0_32 = arith.constant 0 : index
    %81 = vector.load %arg3[%c0_30, %c0_31, %c0_32] : memref<3x4x1xf32, #tpu.memory_space<vmem>>, vector<1x4x1xf32>
    %82 = vector.shape_cast %81 : vector<1x4x1xf32> to vector<4x1xf32>
    %83 = vector.broadcast %82 : vector<4x1xf32> to vector<4x256xf32>
    %84 = arith.addf %80, %83 : vector<4x256xf32>
    %c0_33 = arith.constant 0 : index
    %c0_34 = arith.constant 0 : index
    %c0_35 = arith.constant 0 : index
    %c0_36 = arith.constant 0 : index
    %85 = vector.load %arg4[%c0_33, %c0_34, %c0_35, %c0_36] : memref<1x4x4x256xf32, #tpu.memory_space<vmem>>, vector<1x1x4x256xf32>
    %86 = vector.shape_cast %85 : vector<1x1x4x256xf32> to vector<4x256xf32>
    %87 = vector.shape_cast %84 : vector<4x256xf32> to vector<1x1x4x256xf32>
    tpu.vector_store %arg4[%c0_33, %c0_34, %c0_35, %c0_36], %87 {strides = array<i32>} : memref<1x4x4x256xf32, #tpu.memory_space<vmem>>, vector<1x1x4x256xf32>,
    %c0_37 = arith.constant 0 : index
    %c1 = arith.constant 1 : index
    %c0_38 = arith.constant 0 : index
    %c0_39 = arith.constant 0 : index
    %88 = vector.load %arg1[%c0_37, %c1, %c0_38, %c0_39] : memref<1x4x4x256xf32, #tpu.memory_space<vmem>>, vector<1x1x4x256xf32>
    %89 = vector.shape_cast %88 : vector<1x1x4x256xf32> to vector<4x256xf32>
    %90 = arith.addf %84, %89 : vector<4x256xf32>
    %c17_i32_40 = arith.constant 17 : i32
    %91 = tpu.dynamic_rotate %90 by %c17_i32_40 dim 1 : vector<4x256xf32>, i32 -> vector<4x256xf32>
    %92 = arith.mulf %91, %11 : vector<4x256xf32>
    %c0_41 = arith.constant 0 : index
    %c0_42 = arith.constant 0 : index
    %93 = vector.load %arg5[%c0_41, %c0_42] : memref<36x256xf32, #tpu.memory_space<vmem>>, vector<4x256xf32>
    tpu.vector_store %arg5[%c0_41, %c0_42], %92 {strides = array<i32>} : memref<36x256xf32, #tpu.memory_space<vmem>>, vector<4x256xf32>,
    %c16_i32_43 = arith.constant 16 : i32
    %94 = tpu.dynamic_rotate %90 by %c16_i32_43 dim 1 : vector<4x256xf32>, i32 -> vector<4x256xf32>
    %95 = arith.mulf %94, %15 : vector<4x256xf32>
    %c4_44 = arith.constant 4 : index
    %c0_45 = arith.constant 0 : index
    %96 = vector.load %arg5[%c4_44, %c0_45] : memref<36x256xf32, #tpu.memory_space<vmem>>, vector<4x256xf32>
    tpu.vector_store %arg5[%c4_44, %c0_45], %95 {strides = array<i32>} : memref<36x256xf32, #tpu.memory_space<vmem>>, vector<4x256xf32>,
    %c15_i32_46 = arith.constant 15 : i32
    %97 = tpu.dynamic_rotate %90 by %c15_i32_46 dim 1 : vector<4x256xf32>, i32 -> vector<4x256xf32>
    %98 = arith.mulf %97, %22 : vector<4x256xf32>
    %c8_47 = arith.constant 8 : index
    %c0_48 = arith.constant 0 : index
    %99 = vector.load %arg5[%c8_47, %c0_48] : memref<36x256xf32, #tpu.memory_space<vmem>>, vector<4x256xf32>
    tpu.vector_store %arg5[%c8_47, %c0_48], %98 {strides = array<i32>} : memref<36x256xf32, #tpu.memory_space<vmem>>, vector<4x256xf32>,
    %c1_i32_49 = arith.constant 1 : i32
    %100 = tpu.dynamic_rotate %90 by %c1_i32_49 dim 1 : vector<4x256xf32>, i32 -> vector<4x256xf32>
    %101 = arith.mulf %100, %26 : vector<4x256xf32>
    %c12_50 = arith.constant 12 : index
    %c0_51 = arith.constant 0 : index
    %102 = vector.load %arg5[%c12_50, %c0_51] : memref<36x256xf32, #tpu.memory_space<vmem>>, vector<4x256xf32>
    tpu.vector_store %arg5[%c12_50, %c0_51], %101 {strides = array<i32>} : memref<36x256xf32, #tpu.memory_space<vmem>>, vector<4x256xf32>,
    %c16_52 = arith.constant 16 : index
    %c0_53 = arith.constant 0 : index
    %103 = vector.load %arg5[%c16_52, %c0_53] : memref<36x256xf32, #tpu.memory_space<vmem>>, vector<4x256xf32>
    tpu.vector_store %arg5[%c16_52, %c0_53], %90 {strides = array<i32>} : memref<36x256xf32, #tpu.memory_space<vmem>>, vector<4x256xf32>,
    %c255_i32_54 = arith.constant 255 : i32
    %104 = tpu.dynamic_rotate %90 by %c255_i32_54 dim 1 : vector<4x256xf32>, i32 -> vector<4x256xf32>
    %105 = arith.mulf %104, %30 : vector<4x256xf32>
    %c20_55 = arith.constant 20 : index
    %c0_56 = arith.constant 0 : index
    %106 = vector.load %arg5[%c20_55, %c0_56] : memref<36x256xf32, #tpu.memory_space<vmem>>, vector<4x256xf32>
    tpu.vector_store %arg5[%c20_55, %c0_56], %105 {strides = array<i32>} : memref<36x256xf32, #tpu.memory_space<vmem>>, vector<4x256xf32>,
    %c241_i32_57 = arith.constant 241 : i32
    %107 = tpu.dynamic_rotate %90 by %c241_i32_57 dim 1 : vector<4x256xf32>, i32 -> vector<4x256xf32>
    %108 = arith.mulf %107, %37 : vector<4x256xf32>
    %c24_58 = arith.constant 24 : index
    %c0_59 = arith.constant 0 : index
    %109 = vector.load %arg5[%c24_58, %c0_59] : memref<36x256xf32, #tpu.memory_space<vmem>>, vector<4x256xf32>
    tpu.vector_store %arg5[%c24_58, %c0_59], %108 {strides = array<i32>} : memref<36x256xf32, #tpu.memory_space<vmem>>, vector<4x256xf32>,
    %c240_i32_60 = arith.constant 240 : i32
    %110 = tpu.dynamic_rotate %90 by %c240_i32_60 dim 1 : vector<4x256xf32>, i32 -> vector<4x256xf32>
    %111 = arith.mulf %110, %41 : vector<4x256xf32>
    %c28_61 = arith.constant 28 : index
    %c0_62 = arith.constant 0 : index
    %112 = vector.load %arg5[%c28_61, %c0_62] : memref<36x256xf32, #tpu.memory_space<vmem>>, vector<4x256xf32>
    tpu.vector_store %arg5[%c28_61, %c0_62], %111 {strides = array<i32>} : memref<36x256xf32, #tpu.memory_space<vmem>>, vector<4x256xf32>,
    %c239_i32_63 = arith.constant 239 : i32
    %113 = tpu.dynamic_rotate %90 by %c239_i32_63 dim 1 : vector<4x256xf32>, i32 -> vector<4x256xf32>
    %114 = arith.mulf %113, %48 : vector<4x256xf32>
    %c32_64 = arith.constant 32 : index
    %c0_65 = arith.constant 0 : index
    %115 = vector.load %arg5[%c32_64, %c0_65] : memref<36x256xf32, #tpu.memory_space<vmem>>, vector<4x256xf32>
    tpu.vector_store %arg5[%c32_64, %c0_65], %114 {strides = array<i32>} : memref<36x256xf32, #tpu.memory_space<vmem>>, vector<4x256xf32>,
    %c1_66 = arith.constant 1 : index
    %c0_67 = arith.constant 0 : index
    %c0_68 = arith.constant 0 : index
    %116 = vector.load %arg2[%c1_66, %c0_67, %c0_68] : memref<3x4x36xbf16, #tpu.memory_space<vmem>>, vector<1x4x36xbf16>
    %117 = vector.shape_cast %116 : vector<1x4x36xbf16> to vector<4x36xbf16>
    %c0_69 = arith.constant 0 : index
    %c0_70 = arith.constant 0 : index
    %118 = vector.load %arg5[%c0_69, %c0_70] : memref<36x256xf32, #tpu.memory_space<vmem>>, vector<36x256xf32>
    %119 = arith.truncf %118 : vector<36x256xf32> to vector<36x256xbf16>
    %cst_71 = arith.constant dense<0.000000e+00> : vector<4x256xf32>
    %120 = tpu.matmul %117, %119, %cst_71 {dimension_numbers = #tpu.dot_dimension_numbers<[1], [0], [0], [1], [0, 0, 1, 1], [], []>} : vector<4x36xbf16>, vector<36x256xbf16>, vector<4x256xf32> -> vector<4x256xf32>
    %c1_72 = arith.constant 1 : index
    %c0_73 = arith.constant 0 : index
    %c0_74 = arith.constant 0 : index
    %121 = vector.load %arg3[%c1_72, %c0_73, %c0_74] : memref<3x4x1xf32, #tpu.memory_space<vmem>>, vector<1x4x1xf32>
    %122 = vector.shape_cast %121 : vector<1x4x1xf32> to vector<4x1xf32>
    %123 = vector.broadcast %122 : vector<4x1xf32> to vector<4x256xf32>
    %124 = arith.addf %120, %123 : vector<4x256xf32>
    %c0_75 = arith.constant 0 : index
    %c1_76 = arith.constant 1 : index
    %c0_77 = arith.constant 0 : index
    %c0_78 = arith.constant 0 : index
    %125 = vector.load %arg4[%c0_75, %c1_76, %c0_77, %c0_78] : memref<1x4x4x256xf32, #tpu.memory_space<vmem>>, vector<1x1x4x256xf32>
    %126 = vector.shape_cast %125 : vector<1x1x4x256xf32> to vector<4x256xf32>
    %127 = vector.shape_cast %124 : vector<4x256xf32> to vector<1x1x4x256xf32>
    tpu.vector_store %arg4[%c0_75, %c1_76, %c0_77, %c0_78], %127 {strides = array<i32>} : memref<1x4x4x256xf32, #tpu.memory_space<vmem>>, vector<1x1x4x256xf32>,
    %c0_79 = arith.constant 0 : index
    %c2 = arith.constant 2 : index
    %c0_80 = arith.constant 0 : index
    %c0_81 = arith.constant 0 : index
    %128 = vector.load %arg1[%c0_79, %c2, %c0_80, %c0_81] : memref<1x4x4x256xf32, #tpu.memory_space<vmem>>, vector<1x1x4x256xf32>
    %129 = vector.shape_cast %128 : vector<1x1x4x256xf32> to vector<4x256xf32>
    %130 = arith.addf %124, %129 : vector<4x256xf32>
    %c17_i32_82 = arith.constant 17 : i32
    %131 = tpu.dynamic_rotate %130 by %c17_i32_82 dim 1 : vector<4x256xf32>, i32 -> vector<4x256xf32>
    %132 = arith.mulf %131, %11 : vector<4x256xf32>
    %c0_83 = arith.constant 0 : index
    %c0_84 = arith.constant 0 : index
    %133 = vector.load %arg5[%c0_83, %c0_84] : memref<36x256xf32, #tpu.memory_space<vmem>>, vector<4x256xf32>
    tpu.vector_store %arg5[%c0_83, %c0_84], %132 {strides = array<i32>} : memref<36x256xf32, #tpu.memory_space<vmem>>, vector<4x256xf32>,
    %c16_i32_85 = arith.constant 16 : i32
    %134 = tpu.dynamic_rotate %130 by %c16_i32_85 dim 1 : vector<4x256xf32>, i32 -> vector<4x256xf32>
    %135 = arith.mulf %134, %15 : vector<4x256xf32>
    %c4_86 = arith.constant 4 : index
    %c0_87 = arith.constant 0 : index
    %136 = vector.load %arg5[%c4_86, %c0_87] : memref<36x256xf32, #tpu.memory_space<vmem>>, vector<4x256xf32>
    tpu.vector_store %arg5[%c4_86, %c0_87], %135 {strides = array<i32>} : memref<36x256xf32, #tpu.memory_space<vmem>>, vector<4x256xf32>,
    %c15_i32_88 = arith.constant 15 : i32
    %137 = tpu.dynamic_rotate %130 by %c15_i32_88 dim 1 : vector<4x256xf32>, i32 -> vector<4x256xf32>
    %138 = arith.mulf %137, %22 : vector<4x256xf32>
    %c8_89 = arith.constant 8 : index
    %c0_90 = arith.constant 0 : index
    %139 = vector.load %arg5[%c8_89, %c0_90] : memref<36x256xf32, #tpu.memory_space<vmem>>, vector<4x256xf32>
    tpu.vector_store %arg5[%c8_89, %c0_90], %138 {strides = array<i32>} : memref<36x256xf32, #tpu.memory_space<vmem>>, vector<4x256xf32>,
    %c1_i32_91 = arith.constant 1 : i32
    %140 = tpu.dynamic_rotate %130 by %c1_i32_91 dim 1 : vector<4x256xf32>, i32 -> vector<4x256xf32>
    %141 = arith.mulf %140, %26 : vector<4x256xf32>
    %c12_92 = arith.constant 12 : index
    %c0_93 = arith.constant 0 : index
    %142 = vector.load %arg5[%c12_92, %c0_93] : memref<36x256xf32, #tpu.memory_space<vmem>>, vector<4x256xf32>
    tpu.vector_store %arg5[%c12_92, %c0_93], %141 {strides = array<i32>} : memref<36x256xf32, #tpu.memory_space<vmem>>, vector<4x256xf32>,
    %c16_94 = arith.constant 16 : index
    %c0_95 = arith.constant 0 : index
    %143 = vector.load %arg5[%c16_94, %c0_95] : memref<36x256xf32, #tpu.memory_space<vmem>>, vector<4x256xf32>
    tpu.vector_store %arg5[%c16_94, %c0_95], %130 {strides = array<i32>} : memref<36x256xf32, #tpu.memory_space<vmem>>, vector<4x256xf32>,
    %c255_i32_96 = arith.constant 255 : i32
    %144 = tpu.dynamic_rotate %130 by %c255_i32_96 dim 1 : vector<4x256xf32>, i32 -> vector<4x256xf32>
    %145 = arith.mulf %144, %30 : vector<4x256xf32>
    %c20_97 = arith.constant 20 : index
    %c0_98 = arith.constant 0 : index
    %146 = vector.load %arg5[%c20_97, %c0_98] : memref<36x256xf32, #tpu.memory_space<vmem>>, vector<4x256xf32>
    tpu.vector_store %arg5[%c20_97, %c0_98], %145 {strides = array<i32>} : memref<36x256xf32, #tpu.memory_space<vmem>>, vector<4x256xf32>,
    %c241_i32_99 = arith.constant 241 : i32
    %147 = tpu.dynamic_rotate %130 by %c241_i32_99 dim 1 : vector<4x256xf32>, i32 -> vector<4x256xf32>
    %148 = arith.mulf %147, %37 : vector<4x256xf32>
    %c24_100 = arith.constant 24 : index
    %c0_101 = arith.constant 0 : index
    %149 = vector.load %arg5[%c24_100, %c0_101] : memref<36x256xf32, #tpu.memory_space<vmem>>, vector<4x256xf32>
    tpu.vector_store %arg5[%c24_100, %c0_101], %148 {strides = array<i32>} : memref<36x256xf32, #tpu.memory_space<vmem>>, vector<4x256xf32>,
    %c240_i32_102 = arith.constant 240 : i32
    %150 = tpu.dynamic_rotate %130 by %c240_i32_102 dim 1 : vector<4x256xf32>, i32 -> vector<4x256xf32>
    %151 = arith.mulf %150, %41 : vector<4x256xf32>
    %c28_103 = arith.constant 28 : index
    %c0_104 = arith.constant 0 : index
    %152 = vector.load %arg5[%c28_103, %c0_104] : memref<36x256xf32, #tpu.memory_space<vmem>>, vector<4x256xf32>
    tpu.vector_store %arg5[%c28_103, %c0_104], %151 {strides = array<i32>} : memref<36x256xf32, #tpu.memory_space<vmem>>, vector<4x256xf32>,
    %c239_i32_105 = arith.constant 239 : i32
    %153 = tpu.dynamic_rotate %130 by %c239_i32_105 dim 1 : vector<4x256xf32>, i32 -> vector<4x256xf32>
    %154 = arith.mulf %153, %48 : vector<4x256xf32>
    %c32_106 = arith.constant 32 : index
    %c0_107 = arith.constant 0 : index
    %155 = vector.load %arg5[%c32_106, %c0_107] : memref<36x256xf32, #tpu.memory_space<vmem>>, vector<4x256xf32>
    tpu.vector_store %arg5[%c32_106, %c0_107], %154 {strides = array<i32>} : memref<36x256xf32, #tpu.memory_space<vmem>>, vector<4x256xf32>,
    %c2_108 = arith.constant 2 : index
    %c0_109 = arith.constant 0 : index
    %c0_110 = arith.constant 0 : index
    %156 = vector.load %arg2[%c2_108, %c0_109, %c0_110] : memref<3x4x36xbf16, #tpu.memory_space<vmem>>, vector<1x4x36xbf16>
    %157 = vector.shape_cast %156 : vector<1x4x36xbf16> to vector<4x36xbf16>
    %c0_111 = arith.constant 0 : index
    %c0_112 = arith.constant 0 : index
    %158 = vector.load %arg5[%c0_111, %c0_112] : memref<36x256xf32, #tpu.memory_space<vmem>>, vector<36x256xf32>
    %159 = arith.truncf %158 : vector<36x256xf32> to vector<36x256xbf16>
    %cst_113 = arith.constant dense<0.000000e+00> : vector<4x256xf32>
    %160 = tpu.matmul %157, %159, %cst_113 {dimension_numbers = #tpu.dot_dimension_numbers<[1], [0], [0], [1], [0, 0, 1, 1], [], []>} : vector<4x36xbf16>, vector<36x256xbf16>, vector<4x256xf32> -> vector<4x256xf32>
    %c2_114 = arith.constant 2 : index
    %c0_115 = arith.constant 0 : index
    %c0_116 = arith.constant 0 : index
    %161 = vector.load %arg3[%c2_114, %c0_115, %c0_116] : memref<3x4x1xf32, #tpu.memory_space<vmem>>, vector<1x4x1xf32>
    %162 = vector.shape_cast %161 : vector<1x4x1xf32> to vector<4x1xf32>
    %163 = vector.broadcast %162 : vector<4x1xf32> to vector<4x256xf32>
    %164 = arith.addf %160, %163 : vector<4x256xf32>
    %c0_117 = arith.constant 0 : index
    %c2_118 = arith.constant 2 : index
    %c0_119 = arith.constant 0 : index
    %c0_120 = arith.constant 0 : index
    %165 = vector.load %arg4[%c0_117, %c2_118, %c0_119, %c0_120] : memref<1x4x4x256xf32, #tpu.memory_space<vmem>>, vector<1x1x4x256xf32>
    %166 = vector.shape_cast %165 : vector<1x1x4x256xf32> to vector<4x256xf32>
    %167 = vector.shape_cast %164 : vector<4x256xf32> to vector<1x1x4x256xf32>
    tpu.vector_store %arg4[%c0_117, %c2_118, %c0_119, %c0_120], %167 {strides = array<i32>} : memref<1x4x4x256xf32, #tpu.memory_space<vmem>>, vector<1x1x4x256xf32>,
    %c0_121 = arith.constant 0 : index
    %c3 = arith.constant 3 : index
    %c0_122 = arith.constant 0 : index
    %c0_123 = arith.constant 0 : index
    %168 = vector.load %arg1[%c0_121, %c3, %c0_122, %c0_123] : memref<1x4x4x256xf32, #tpu.memory_space<vmem>>, vector<1x1x4x256xf32>
    %169 = vector.shape_cast %168 : vector<1x1x4x256xf32> to vector<4x256xf32>
    %c0_124 = arith.constant 0 : index
    %c3_125 = arith.constant 3 : index
    %c0_126 = arith.constant 0 : index
    %c0_127 = arith.constant 0 : index
    %170 = vector.load %arg4[%c0_124, %c3_125, %c0_126, %c0_127] : memref<1x4x4x256xf32, #tpu.memory_space<vmem>>, vector<1x1x4x256xf32>
    %171 = vector.shape_cast %170 : vector<1x1x4x256xf32> to vector<4x256xf32>
    %172 = vector.shape_cast %169 : vector<4x256xf32> to vector<1x1x4x256xf32>
    tpu.vector_store %arg4[%c0_124, %c3_125, %c0_126, %c0_127], %172 {strides = array<i32>} : memref<1x4x4x256xf32, #tpu.memory_space<vmem>>, vector<1x1x4x256xf32>,
    return
  }
  func.func @transform_0(%arg0: i32) -> (i32, i32, i32, i32) {
    %c0_i32 = arith.constant 0 : i32
    %c0_i32_0 = arith.constant 0 : i32
    %c0_i32_1 = arith.constant 0 : i32
    %c0_i32_2 = arith.constant 0 : i32
    return %arg0, %c0_i32, %c0_i32_0, %c0_i32_1 : i32, i32, i32, i32
  }
  func.func @transform_1(%arg0: i32) -> (i32, i32, i32) {
    %c0_i32 = arith.constant 0 : i32
    %c0_i32_0 = arith.constant 0 : i32
    %c0_i32_1 = arith.constant 0 : i32
    %c0_i32_2 = arith.constant 0 : i32
    return %c0_i32, %c0_i32_0, %c0_i32_1 : i32, i32, i32
  }
  func.func @transform_2(%arg0: i32) -> (i32, i32, i32) {
    %c0_i32 = arith.constant 0 : i32
    %c0_i32_0 = arith.constant 0 : i32
    %c0_i32_1 = arith.constant 0 : i32
    %c0_i32_2 = arith.constant 0 : i32
    return %c0_i32, %c0_i32_0, %c0_i32_1 : i32, i32, i32
  }
  func.func @transform_3(%arg0: i32) -> (i32, i32, i32, i32) {
    %c0_i32 = arith.constant 0 : i32
    %c0_i32_0 = arith.constant 0 : i32
    %c0_i32_1 = arith.constant 0 : i32
    %c0_i32_2 = arith.constant 0 : i32
    return %arg0, %c0_i32, %c0_i32_0, %c0_i32_1 : i32, i32, i32, i32
  }
}

</mosaic_0001>

<llo_original>
// kernel: scale_conv2d.1
$region0: #{scale_conv2d.1}
  #allocation0 [shape = 'u32[]', space=smem, size = 0x4, offset = 0x4, fixed_abs, tag = 'smem constant byte address 0x4 - core index']
  #allocation1 [shape = 'u32[144,128]{1,0:T(1,128)}', space=vmem, size = 0x12000, scoped, tag = 'internal scratch']
  #allocation2 [shape = 'f32[36,256]{1,0:T(8,128)}', space=vmem, size = 0xa000, scoped, tag = 'scratch operand']
  %s0 = inlined_call_operand.vmem [shape: f32[2,4,4,256], index: 0, kind: input, shape index: {}]
  %s1 = inlined_call_operand.vmem [shape: bf16[3,4,36], index: 1, kind: input, shape index: {}]
  %s2 = inlined_call_operand.vmem [shape: f32[3,4,1], index: 2, kind: input, shape index: {}]
  %s3 = inlined_call_operand.vmem [shape: f32[2,4,4,256], index: 3, kind: output, shape index: {}]
  %s4 = sld [smem:[#allocation0]]
  $region45: #{scale_conv2d.1} parent=0
    _
  %s6 = ssub.s32 1, %s4
  %s7 = scalar_select 0, %s6, %s4
  loop: start=0, step=1, limit=4
  $region2: #{scale_conv2d.1} parent=0 // loop_pre_header
    _
  $region3: #{scale_conv2d.1} parent=0 // loop_header
    %s9 = sphi 0, %s13
    %p10 = scmp.ge.s32.totalorder %s9, 4
    %s19 = sphi 0, %s21
    %s22 = sphi 0, %s19
    %s23 = sphi 0, %s22
    %s39 = sphi 0, %s23
    %s43 = sphi 0, %s43
    %s45 = sphi 0, %s43
    %s46 = sphi 0, %s45
    %s60 = sphi 0, %s46
    %s64 = sphi 0, %s64
    %s66 = sphi 0, %s64
    %s67 = sphi 0, %s66
    %s81 = sphi 0, %s67
    %s87 = sphi 0, %s89
    %s90 = sphi 0, %s87
    %s91 = sphi 0, %s90
    %s107 = sphi 0, %s91
  $region4: #{scale_conv2d.1} parent=0 // loop_header_branch
    %12 = sbr.rel (%p10) target = $region8
  $region5: #{scale_conv2d.1} parent=0 // loop_body
    %s14 = ssub.s32 %s9, 1
    %s15 = ssub.s32 %s9, 2
    %s16 = sadd.s32 %s9, 1
    %s17 = ssub.s32 %s9, %s16
    %p18 = scmp.eq.s32.totalorder %s17, 0
    %s20 = sadd.s32 %s19, 1
    %s21 = scalar_select %p18, %s19, %s20
    %p24 = pneg %p18
    %p25 = scmp.eq.s32.totalorder %s9, 1
    %p26 = por %p24, %p25
    %p27 = scmp.ne.s32.totalorder %s19, %s22
    %p28 = scmp.eq.s32.totalorder %s9, 0
    %p29 = por %p27, %p28
    %p30 = scmp.ne.s32.totalorder %s19, %s22
    %p31 = scmp.eq.s32.totalorder %s14, 1
    %p32 = por %p30, %p31
    %p33 = scmp.ne.s32.totalorder %s22, %s23
    %p34 = scmp.eq.s32.totalorder %s14, 0
    %p35 = por %p33, %p34
    %p36 = scmp.ne.s32.totalorder %s22, %s23
    %p37 = scmp.eq.s32.totalorder %s15, 1
    %p38 = por %p36, %p37
    %p40 = scmp.ne.s32.totalorder %s23, %s39
    %p41 = scmp.eq.s32.totalorder %s15, 0
    %p42 = por %p40, %p41
    %s44 = sadd.s32 %s43, 1
    %p47 = scmp.eq.s32.totalorder %s9, 1
    %p48 = scmp.ne.s32.totalorder %s43, %s45
    %p49 = scmp.eq.s32.totalorder %s9, 0
    %p50 = por %p48, %p49
    %p51 = scmp.ne.s32.totalorder %s43, %s45
    %p52 = scmp.eq.s32.totalorder %s14, 1
    %p53 = por %p51, %p52
    %p54 = scmp.ne.s32.totalorder %s45, %s46
    %p55 = scmp.eq.s32.totalorder %s14, 0
    %p56 = por %p54, %p55
    %p57 = scmp.ne.s32.totalorder %s45, %s46
    %p58 = scmp.eq.s32.totalorder %s15, 1
    %p59 = por %p57, %p58
    %p61 = scmp.ne.s32.totalorder %s46, %s60
    %p62 = scmp.eq.s32.totalorder %s15, 0
    %p63 = por %p61, %p62
    %s65 = sadd.s32 %s64, 1
    %p68 = scmp.eq.s32.totalorder %s9, 1
    %p69 = scmp.ne.s32.totalorder %s64, %s66
    %p70 = scmp.eq.s32.totalorder %s9, 0
    %p71 = por %p69, %p70
    %p72 = scmp.ne.s32.totalorder %s64, %s66
    %p73 = scmp.eq.s32.totalorder %s14, 1
    %p74 = por %p72, %p73
    %p75 = scmp.ne.s32.totalorder %s66, %s67
    %p76 = scmp.eq.s32.totalorder %s14, 0
    %p77 = por %p75, %p76
    %p78 = scmp.ne.s32.totalorder %s66, %s67
    %p79 = scmp.eq.s32.totalorder %s15, 1
    %p80 = por %p78, %p79
    %p82 = scmp.ne.s32.totalorder %s67, %s81
    %p83 = scmp.eq.s32.totalorder %s15, 0
    %p84 = por %p82, %p83
    %s85 = ssub.s32 %s9, %s16
    %p86 = scmp.eq.s32.totalorder %s85, 0
    %s88 = sadd.s32 %s87, 1
    %s89 = scalar_select %p86, %s87, %s88
    %p92 = pneg %p86
    %p93 = scmp.eq.s32.totalorder %s9, 1
    %p94 = por %p92, %p93
    %p95 = scmp.ne.s32.totalorder %s87, %s90
    %p96 = scmp.eq.s32.totalorder %s9, 0
    %p97 = por %p95, %p96
    %p98 = scmp.ne.s32.totalorder %s87, %s90
    %p99 = scmp.eq.s32.totalorder %s14, 1
    %p100 = por %p98, %p99
    %p101 = scmp.ne.s32.totalorder %s90, %s91
    %p102 = scmp.eq.s32.totalorder %s14, 0
    %p103 = por %p101, %p102
    %p104 = scmp.ne.s32.totalorder %s90, %s91
    %p105 = scmp.eq.s32.totalorder %s15, 1
    %p106 = por %p104, %p105
    %p108 = scmp.ne.s32.totalorder %s91, %s107
    %p109 = scmp.eq.s32.totalorder %s15, 0
    %p110 = por %p108, %p109
    %p111 = scmp.le.s32.totalorder 1, %s9
    %p112 = scmp.lt.s32.totalorder %s9, 3
    %p113 = pnand %p111, %p112
    %p114 = pneg %p113
    // Predicated region
    $region9: #{scale_conv2d.1} parent=5 // pred_check
      _
    $region10: #{scale_conv2d.1} parent=5 // pred_check_branch
      %116 = sbr.rel (%p113) target = $region12
    $region11: #{scale_conv2d.1} parent=5 // pred_region
      %s117 = ssub.s32 %s9, 1
      // Predicated region
      $region13: #{scale_conv2d.1} parent=11 // pred_check
        %p118 = pneg %p56
      $region14: #{scale_conv2d.1} parent=11 // pred_check_branch
        %120 = sbr.rel (%p118) target = $region16
      $region15: #{scale_conv2d.1} parent=11 // pred_region
        _
      $region16: #{scale_conv2d.1} parent=11 // pred_fallthru
        _
      // Predicated region
      $region17: #{scale_conv2d.1} parent=11 // pred_check
        %p121 = pneg %p77
      $region18: #{scale_conv2d.1} parent=11 // pred_check_branch
        %123 = sbr.rel (%p121) target = $region20
      $region19: #{scale_conv2d.1} parent=11 // pred_region
        _
      $region20: #{scale_conv2d.1} parent=11 // pred_fallthru
        _
    $region12: #{scale_conv2d.1} parent=5 // pred_fallthru
      _
    %p124 = scmp.lt.s32.totalorder %s9, 2
    // Predicated region
    $region21: #{scale_conv2d.1} parent=5 // pred_check
      %p125 = pneg %p124
    $region22: #{scale_conv2d.1} parent=5 // pred_check_branch
      %127 = sbr.rel (%p125) target = $region24
    $region23: #{scale_conv2d.1} parent=5 // pred_region
      // Predicated region
      $region25: #{scale_conv2d.1} parent=23 // pred_check
        %p128 = pneg %p29
      $region26: #{scale_conv2d.1} parent=23 // pred_check_branch
        %130 = sbr.rel (%p128) target = $region28
      $region27: #{scale_conv2d.1} parent=23 // pred_region
        %p131 = scmp.lt.s32.totalorder %s9, 1
        %s132 = scalar_select %p131, %s9, 1
        %s133 = smul.addr %s132, 8
        %s134 = smul.addr %s133, 4
        %s135 = scalar_lea.vmem %s0, %s134
      $region28: #{scale_conv2d.1} parent=23 // pred_fallthru
        _
    $region24: #{scale_conv2d.1} parent=5 // pred_fallthru
      _
    %p136 = scmp.le.s32.totalorder 1, %s9
    %p137 = scmp.lt.s32.totalorder %s9, 3
    %p138 = pnand %p136, %p137
    %p139 = pneg %p138
    // Predicated region
    $region29: #{scale_conv2d.1} parent=5 // pred_check
      _
    $region30: #{scale_conv2d.1} parent=5 // pred_check_branch
      %141 = sbr.rel (%p138) target = $region32
    $region31: #{scale_conv2d.1} parent=5 // pred_region
      %s142 = ssub.s32 %s9, 1
      %p143 = scmp.lt.s32.totalorder %s14, 1
      %s144 = scalar_select %p143, %s14, 1
      %s145 = smul.addr %s144, 8
      %s146 = smul.addr %s145, 4
      %s147 = scalar_lea.vmem %s0, %s146
      %p148 = pneg %p35
      %p149 = pneg %p32
      %p150 = pneg %p56
      %p151 = pneg %p53
      %p152 = pneg %p77
      %p153 = pneg %p74
      %p154 = pneg %p103
      %p155 = pneg %p100
      %p156 = scmp.lt.s32.totalorder %s14, 1
      %s157 = scalar_select %p156, %s14, 1
      %s158 = smul.addr %s157, 8
      %s159 = smul.addr %s158, 4
      %s160 = scalar_lea.vmem %s3, %s159
      %p161 = scmp.lt.s32.totalorder %s14, 1
      %s162 = scalar_select %p161, %s14, 1
      %s163 = smul.addr %s162, 8
      %s164 = smul.addr %s163, 4
      %s165 = scalar_lea.vmem %s0, %s164
      %p166 = scmp.lt.s32.totalorder %s14, 1
      %s167 = scalar_select %p166, %s14, 1
      %s168 = smul.addr %s167, 8
      %s169 = smul.addr %s168, 4
      %s170 = scalar_lea.vmem %s3, %s169
      %v172 = vlaneseq
      %v173 = vand.u32 %v172, 127
      %v174 = vadd.s32 %v173, 128
      %v175 = vand.u32 %v173, 15
      %v176 = vand.u32 %v174, 15
      %v177 = vshra.s32 %v173, 4
      %v178 = vshra.s32 %v174, 4
      %vm179 = vcmp.ge.s32.totalorder %v177, 1
      %vm180 = vcmp.ge.s32.totalorder %v178, 1
      %vm181 = vcmp.ge.s32.totalorder %v175, 1
      %vm182 = vcmp.ge.s32.totalorder %v176, 1
      %vm183 = vmand %vm179, %vm181
      %vm184 = vmand %vm180, %vm182
      %v185 = vsel %vm183, 1, 0
      %v186 = vsel %vm184, 1, 0
      %v187 = vcvt.s32.f32 %v185
      %v188 = vcvt.s32.f32 %v186
      %v189 = vsel %vm179, 1, 0
      %v190 = vsel %vm180, 1, 0
      %v191 = vcvt.s32.f32 %v189
      %v192 = vcvt.s32.f32 %v190
      %vm193 = vcmp.le.s32.totalorder %v175, 14
      %vm194 = vcmp.le.s32.totalorder %v176, 14
      %vm195 = vmand %vm179, %vm193
      %vm196 = vmand %vm180, %vm194
      %v197 = vsel %vm195, 1, 0
      %v198 = vsel %vm196, 1, 0
      %v199 = vcvt.s32.f32 %v197
      %v200 = vcvt.s32.f32 %v198
      %v201 = vsel %vm181, 1, 0
      %v202 = vsel %vm182, 1, 0
      %v203 = vcvt.s32.f32 %v201
      %v204 = vcvt.s32.f32 %v202
      %v205 = vsel %vm193, 1, 0
      %v206 = vsel %vm194, 1, 0
      %v207 = vcvt.s32.f32 %v205
      %v208 = vcvt.s32.f32 %v206
      %vm209 = vcmp.le.s32.totalorder %v177, 14
      %vm210 = vcmp.le.s32.totalorder %v178, 14
      %vm211 = vmand %vm209, %vm181
      %vm212 = vmand %vm210, %vm182
      %v213 = vsel %vm211, 1, 0
      %v214 = vsel %vm212, 1, 0
      %v215 = vcvt.s32.f32 %v213
      %v216 = vcvt.s32.f32 %v214
      %v217 = vsel %vm209, 1, 0
      %v218 = vsel %vm210, 1, 0
      %v219 = vcvt.s32.f32 %v217
      %v220 = vcvt.s32.f32 %v218
      %vm221 = vmand %vm209, %vm193
      %vm222 = vmand %vm210, %vm194
      %v223 = vsel %vm221, 1, 0
      %v224 = vsel %vm222, 1, 0
      %v225 = vcvt.s32.f32 %v223
      %v226 = vcvt.s32.f32 %v224
      %v227 = vld [vmem:[%s165] sm:$0xff]
      %v229 = vcombine.high %v227, %v227
      %231 = vrot.lane.b32.xlu0 %v227, 17
      %v232 = vpop.permute.xlu0 %231
      %233 = vrot.lane.b32.xlu0 %v229, 17
      %v234 = vpop.permute.xlu0 %233
      %vm235 = vcmp.lt.s32.totalorder %v173, 17
      %v236 = vsel %vm235, %v232, %v234
      %v237 = vsel %vm235, %v234, %v232
      %v238 = vmul.f32 %v237, %v187
      %v239 = vmul.f32 %v236, %v188
      %240 = vst [vmem:[#allocation2] sm:$0xf] %v238
      %241 = vst [vmem:[#allocation2 + $0x8] sm:$0xf] %v239
      %242 = vrot.lane.b32.xlu0 %v227, 16
      %v243 = vpop.permute.xlu0 %242
      %244 = vrot.lane.b32.xlu0 %v229, 16
      %v245 = vpop.permute.xlu0 %244
      %vm246 = vcmp.lt.s32.totalorder %v173, 16
      %v247 = vsel %vm246, %v243, %v245
      %v248 = vsel %vm246, %v245, %v243
      %v249 = vmul.f32 %v248, %v191
      %v250 = vmul.f32 %v247, %v192
      %v253 = vrot.slane %v249, 4
      %v254 = vrot.slane %v250, 4
      %257 = vst [vmem:[#allocation2] sm:$0xf0] %v253
      %258 = vst [vmem:[#allocation2 + $0x8] sm:$0xf0] %v254
      %259 = vrot.lane.b32.xlu0 %v227, 15
      %v260 = vpop.permute.xlu0 %259
      %261 = vrot.lane.b32.xlu0 %v229, 15
      %v262 = vpop.permute.xlu0 %261
      %vm263 = vcmp.lt.s32.totalorder %v173, 15
      %v264 = vsel %vm263, %v260, %v262
      %v265 = vsel %vm263, %v262, %v260
      %v266 = vmul.f32 %v265, %v199
      %v267 = vmul.f32 %v264, %v200
      %268 = vst [vmem:[#allocation2 + $0x10] sm:$0xf] %v266
      %269 = vst [vmem:[#allocation2 + $0x18] sm:$0xf] %v267
      %270 = vrot.lane.b32.xlu0 %v227, 1
      %v271 = vpop.permute.xlu0 %270
      %272 = vrot.lane.b32.xlu0 %v229, 1
      %v273 = vpop.permute.xlu0 %272
      %vm274 = vcmp.lt.s32.totalorder %v173, 1
      %v275 = vsel %vm274, %v271, %v273
      %v276 = vsel %vm274, %v273, %v271
      %v277 = vmul.f32 %v276, %v203
      %v278 = vmul.f32 %v275, %v204
      %v281 = vrot.slane %v277, 4
      %v282 = vrot.slane %v278, 4
      %285 = vst [vmem:[#allocation2 + $0x10] sm:$0xf0] %v281
      %286 = vst [vmem:[#allocation2 + $0x18] sm:$0xf0] %v282
      %287 = vst [vmem:[#allocation2 + $0x20] sm:$0xf] %v227
      %288 = vst [vmem:[#allocation2 + $0x28] sm:$0xf] %v229
      %289 = vrot.lane.b32.xlu0 %v227, 127
      %v290 = vpop.permute.xlu0 %289
      %291 = vrot.lane.b32.xlu0 %v229, 127
      %v292 = vpop.permute.xlu0 %291
      %vm293 = vcmp.lt.s32.totalorder %v173, 127
      %v294 = vsel %vm293, %v290, %v292
      %v295 = vsel %vm293, %v292, %v290
      %v296 = vmul.f32 %v294, %v207
      %v297 = vmul.f32 %v295, %v208
      %v300 = vrot.slane %v296, 4
      %v301 = vrot.slane %v297, 4
      %304 = vst [vmem:[#allocation2 + $0x20] sm:$0xf0] %v300
      %305 = vst [vmem:[#allocation2 + $0x28] sm:$0xf0] %v301
      %306 = vrot.lane.b32.xlu0 %v227, 113
      %v307 = vpop.permute.xlu0 %306
      %308 = vrot.lane.b32.xlu0 %v229, 113
      %v309 = vpop.permute.xlu0 %308
      %vm310 = vcmp.lt.s32.totalorder %v173, 113
      %v311 = vsel %vm310, %v307, %v309
      %v312 = vsel %vm310, %v309, %v307
      %v313 = vmul.f32 %v311, %v215
      %v314 = vmul.f32 %v312, %v216
      %315 = vst [vmem:[#allocation2 + $0x30] sm:$0xf] %v313
      %316 = vst [vmem:[#allocation2 + $0x38] sm:$0xf] %v314
      %317 = vrot.lane.b32.xlu0 %v227, 112
      %v318 = vpop.permute.xlu0 %317
      %319 = vrot.lane.b32.xlu0 %v229, 112
      %v320 = vpop.permute.xlu0 %319
      %vm321 = vcmp.lt.s32.totalorder %v173, 112
      %v322 = vsel %vm321, %v318, %v320
      %v323 = vsel %vm321, %v320, %v318
      %v324 = vmul.f32 %v322, %v219
      %v325 = vmul.f32 %v323, %v220
      %v328 = vrot.slane %v324, 4
      %v329 = vrot.slane %v325, 4
      %332 = vst [vmem:[#allocation2 + $0x30] sm:$0xf0] %v328
      %333 = vst [vmem:[#allocation2 + $0x38] sm:$0xf0] %v329
      %334 = vrot.lane.b32.xlu0 %v227, 111
      %v335 = vpop.permute.xlu0 %334
      %336 = vrot.lane.b32.xlu0 %v229, 111
      %v337 = vpop.permute.xlu0 %336
      %vm338 = vcmp.lt.s32.totalorder %v173, 111
      %v339 = vsel %vm338, %v335, %v337
      %v340 = vsel %vm338, %v337, %v335
      %v341 = vmul.f32 %v339, %v225
      %v342 = vmul.f32 %v340, %v226
      %343 = vst [vmem:[#allocation2 + $0x40] sm:$0xf] %v341
      %344 = vst [vmem:[#allocation2 + $0x48] sm:$0xf] %v342
      %v345 = vld [vmem:[%s1] sm:$0x3]
      %v346 = vld [vmem:[#allocation2] sm:$0xff]
      %v347 = vld [vmem:[#allocation2 + $0x8] sm:$0xff]
      %v348 = vld [vmem:[#allocation2 + $0x10] sm:$0xff]
      %v349 = vld [vmem:[#allocation2 + $0x18] sm:$0xff]
      %v350 = vld [vmem:[#allocation2 + $0x20] sm:$0xff]
      %v351 = vld [vmem:[#allocation2 + $0x28] sm:$0xff]
      %v352 = vld [vmem:[#allocation2 + $0x30] sm:$0xff]
      %v353 = vld [vmem:[#allocation2 + $0x38] sm:$0xff]
      %v354 = vld [vmem:[#allocation2 + $0x40] sm:$0xf]
      %v355 = vld [vmem:[#allocation2 + $0x48] sm:$0xf]
      %v356 = vpack.c.bf16 %v348, %v346
      %v357 = vpack.c.bf16 %v349, %v347
      %v358 = vpack.c.bf16 %v352, %v350
      %v359 = vpack.c.bf16 %v353, %v351
      %v360 = vpack.c.bf16 %v354, %v354
      %v361 = vpack.c.bf16 %v355, %v355
      %v362 = vld [vmem:[%s2] sm:$0xf]
      %364 = vset.pattern.permute.xlu0 0
      %365 = vperm.xlu0 %364, %v362
      %v366 = vpop.permute.xlu0 %365
      %vm368 = vcmask 293888
      %v370 = vsel %vm368, %v345, 0
      %vm372 = vcmask 1041408
      %v374 = vsel %vm372, %v360, 0
      %v377 = vsel %vm372, %v361, 0
      %379 = vmatprep.subr.bf16.mxu0 %v357
      %380 = vmatpush1.bf16.msra.mxu0 %v356
      %381 = vmatprep.subr.bf16.mxu0 %v359
      %382 = vmatpush1.bf16.msra.mxu0 %v358
      %383 = vmatprep.subr.bf16.mxu0 %v377
      %384 = vmatpush1.bf16.msra.mxu0 %v374
      %385 = vmatprep.subr.bf16.mxu0 0
      %386 = vmatpush1.bf16.msra.mxu0 0
      %387 = vmatprep.subr.bf16.mxu0 0
      %388 = vmatpush1.bf16.msra.mxu0 0
      %389 = vmatprep.subr.bf16.mxu0 0
      %390 = vmatpush1.bf16.msra.mxu0 0
      %391 = vmatprep.subr.bf16.mxu0 0
      %392 = vmatpush1.bf16.msra.mxu0 0
      %393 = vmatprep.subr.bf16.mxu0 0
      %394 = vmatpush1.bf16.msra.mxu0 0
      %395 = vmatprep.subr.bf16.mxu0 0
      %396 = vmatpush1.bf16.msra.mxu0 0
      %397 = vmatprep.subr.bf16.mxu0 0
      %398 = vmatpush1.bf16.msra.mxu0 0
      %399 = vmatprep.subr.bf16.mxu0 0
      %400 = vmatpush1.bf16.msra.mxu0 0
      %401 = vmatprep.subr.bf16.mxu0 0
      %402 = vmatpush1.bf16.msra.mxu0 0
      %403 = vmatprep.subr.bf16.mxu0 0
      %404 = vmatpush1.bf16.msra.mxu0 0
      %405 = vmatprep.subr.bf16.mxu0 0
      %406 = vmatpush1.bf16.msra.mxu0 0
      %407 = vmatprep.subr.bf16.mxu0 0
      %408 = vmatpush1.bf16.msra.mxu0 0
      %409 = vmatprep.subr.bf16.mxu0 0
      %410 = vmatpush1.bf16.msra.mxu0 0
      %411 = vmatprep.mubr.bf16.mxu0 0
      %412 = vmatmul.mubr.bf16.gmra.mrb[0].mxu0 %v370
      %v413 = vpop.f32.mrb[0].mxu0
      %v414 = vadd.f32 %v366, %v413
      %v415 = vpop.f32.mrb[0].mxu0
      %v416 = vadd.f32 %v366, %v415
      %v417 = vpop.f32.mrb[0].mxu0
      %v418 = vpop.f32.mrb[0].mxu0
      %419 = vdwg.mxu0
      %v422 = vcombine.low %v414, %v416
      %424 = vst [vmem:[%s170] sm:$0xff] %v422
      %s425 = scalar_lea.vmem %s165, 8
      %v426 = vld [vmem:[%s425] sm:$0xff]
      %v428 = vcombine.high %v426, %v426
      %v430 = vadd.f32 %v414, %v426
      %v431 = vadd.f32 %v416, %v428
      %432 = vrot.lane.b32.xlu0 %v430, 17
      %v433 = vpop.permute.xlu0 %432
      %434 = vrot.lane.b32.xlu0 %v431, 17
      %v435 = vpop.permute.xlu0 %434
      %v436 = vsel %vm235, %v433, %v435
      %v437 = vsel %vm235, %v435, %v433
      %v438 = vmul.f32 %v437, %v187
      %v439 = vmul.f32 %v436, %v188
      %440 = vst [vmem:[#allocation2] sm:$0xf] %v438
      %441 = vst [vmem:[#allocation2 + $0x8] sm:$0xf] %v439
      %442 = vrot.lane.b32.xlu0 %v430, 16
      %v443 = vpop.permute.xlu0 %442
      %444 = vrot.lane.b32.xlu0 %v431, 16
      %v445 = vpop.permute.xlu0 %444
      %v446 = vsel %vm246, %v443, %v445
      %v447 = vsel %vm246, %v445, %v443
      %v448 = vmul.f32 %v447, %v191
      %v449 = vmul.f32 %v446, %v192
      %v452 = vrot.slane %v448, 4
      %v453 = vrot.slane %v449, 4
      %456 = vst [vmem:[#allocation2] sm:$0xf0] %v452
      %457 = vst [vmem:[#allocation2 + $0x8] sm:$0xf0] %v453
      %458 = vrot.lane.b32.xlu0 %v430, 15
      %v459 = vpop.permute.xlu0 %458
      %460 = vrot.lane.b32.xlu0 %v431, 15
      %v461 = vpop.permute.xlu0 %460
      %v462 = vsel %vm263, %v459, %v461
      %v463 = vsel %vm263, %v461, %v459
      %v464 = vmul.f32 %v463, %v199
      %v465 = vmul.f32 %v462, %v200
      %466 = vst [vmem:[#allocation2 + $0x10] sm:$0xf] %v464
      %467 = vst [vmem:[#allocation2 + $0x18] sm:$0xf] %v465
      %468 = vrot.lane.b32.xlu0 %v430, 1
      %v469 = vpop.permute.xlu0 %468
      %470 = vrot.lane.b32.xlu0 %v431, 1
      %v471 = vpop.permute.xlu0 %470
      %v472 = vsel %vm274, %v469, %v471
      %v473 = vsel %vm274, %v471, %v469
      %v474 = vmul.f32 %v473, %v203
      %v475 = vmul.f32 %v472, %v204
      %v478 = vrot.slane %v474, 4
      %v479 = vrot.slane %v475, 4
      %482 = vst [vmem:[#allocation2 + $0x10] sm:$0xf0] %v478
      %483 = vst [vmem:[#allocation2 + $0x18] sm:$0xf0] %v479
      %484 = vst [vmem:[#allocation2 + $0x20] sm:$0xf] %v430
      %485 = vst [vmem:[#allocation2 + $0x28] sm:$0xf] %v431
      %486 = vrot.lane.b32.xlu0 %v430, 127
      %v487 = vpop.permute.xlu0 %486
      %488 = vrot.lane.b32.xlu0 %v431, 127
      %v489 = vpop.permute.xlu0 %488
      %v490 = vsel %vm293, %v487, %v489
      %v491 = vsel %vm293, %v489, %v487
      %v492 = vmul.f32 %v490, %v207
      %v493 = vmul.f32 %v491, %v208
      %v496 = vrot.slane %v492, 4
      %v497 = vrot.slane %v493, 4
      %500 = vst [vmem:[#allocation2 + $0x20] sm:$0xf0] %v496
      %501 = vst [vmem:[#allocation2 + $0x28] sm:$0xf0] %v497
      %502 = vrot.lane.b32.xlu0 %v430, 113
      %v503 = vpop.permute.xlu0 %502
      %504 = vrot.lane.b32.xlu0 %v431, 113
      %v505 = vpop.permute.xlu0 %504
      %v506 = vsel %vm310, %v503, %v505
      %v507 = vsel %vm310, %v505, %v503
      %v508 = vmul.f32 %v506, %v215
      %v509 = vmul.f32 %v507, %v216
      %510 = vst [vmem:[#allocation2 + $0x30] sm:$0xf] %v508
      %511 = vst [vmem:[#allocation2 + $0x38] sm:$0xf] %v509
      %512 = vrot.lane.b32.xlu0 %v430, 112
      %v513 = vpop.permute.xlu0 %512
      %514 = vrot.lane.b32.xlu0 %v431, 112
      %v515 = vpop.permute.xlu0 %514
      %v516 = vsel %vm321, %v513, %v515
      %v517 = vsel %vm321, %v515, %v513
      %v518 = vmul.f32 %v516, %v219
      %v519 = vmul.f32 %v517, %v220
      %v522 = vrot.slane %v518, 4
      %v523 = vrot.slane %v519, 4
      %526 = vst [vmem:[#allocation2 + $0x30] sm:$0xf0] %v522
      %527 = vst [vmem:[#allocation2 + $0x38] sm:$0xf0] %v523
      %528 = vrot.lane.b32.xlu0 %v430, 111
      %v529 = vpop.permute.xlu0 %528
      %530 = vrot.lane.b32.xlu0 %v431, 111
      %v531 = vpop.permute.xlu0 %530
      %v532 = vsel %vm338, %v529, %v531
      %v533 = vsel %vm338, %v531, %v529
      %v534 = vmul.f32 %v532, %v225
      %v535 = vmul.f32 %v533, %v226
      %536 = vst [vmem:[#allocation2 + $0x40] sm:$0xf] %v534
      %537 = vst [vmem:[#allocation2 + $0x48] sm:$0xf] %v535
      %s538 = scalar_lea.vmem %s1, 2
      %v539 = vld [vmem:[%s538] sm:$0x3]
      %v540 = vld [vmem:[#allocation2] sm:$0xff]
      %v541 = vld [vmem:[#allocation2 + $0x8] sm:$0xff]
      %v542 = vld [vmem:[#allocation2 + $0x10] sm:$0xff]
      %v543 = vld [vmem:[#allocation2 + $0x18] sm:$0xff]
      %v544 = vld [vmem:[#allocation2 + $0x20] sm:$0xff]
      %v545 = vld [vmem:[#allocation2 + $0x28] sm:$0xff]
      %v546 = vld [vmem:[#allocation2 + $0x30] sm:$0xff]
      %v547 = vld [vmem:[#allocation2 + $0x38] sm:$0xff]
      %v548 = vld [vmem:[#allocation2 + $0x40] sm:$0xf]
      %v549 = vld [vmem:[#allocation2 + $0x48] sm:$0xf]
      %v550 = vpack.c.bf16 %v542, %v540
      %v551 = vpack.c.bf16 %v543, %v541
      %v552 = vpack.c.bf16 %v546, %v544
      %v553 = vpack.c.bf16 %v547, %v545
      %v554 = vpack.c.bf16 %v548, %v548
      %v555 = vpack.c.bf16 %v549, %v549
      %s556 = scalar_lea.vmem %s2, 4
      %v557 = vld [vmem:[%s556] sm:$0xf]
      %559 = vset.pattern.permute.xlu0 0
      %560 = vperm.xlu0 %559, %v557
      %v561 = vpop.permute.xlu0 %560
      %v564 = vsel %vm368, %v539, 0
      %v567 = vsel %vm372, %v554, 0
      %v570 = vsel %vm372, %v555, 0
      %572 = vmatprep.subr.bf16.mxu0 %v551
      %573 = vmatpush1.bf16.msra.mxu0 %v550
      %574 = vmatprep.subr.bf16.mxu0 %v553
      %575 = vmatpush1.bf16.msra.mxu0 %v552
      %576 = vmatprep.subr.bf16.mxu0 %v570
      %577 = vmatpush1.bf16.msra.mxu0 %v567
      %578 = vmatprep.subr.bf16.mxu0 0
      %579 = vmatpush1.bf16.msra.mxu0 0
      %580 = vmatprep.subr.bf16.mxu0 0
      %581 = vmatpush1.bf16.msra.mxu0 0
      %582 = vmatprep.subr.bf16.mxu0 0
      %583 = vmatpush1.bf16.msra.mxu0 0
      %584 = vmatprep.subr.bf16.mxu0 0
      %585 = vmatpush1.bf16.msra.mxu0 0
      %586 = vmatprep.subr.bf16.mxu0 0
      %587 = vmatpush1.bf16.msra.mxu0 0
      %588 = vmatprep.subr.bf16.mxu0 0
      %589 = vmatpush1.bf16.msra.mxu0 0
      %590 = vmatprep.subr.bf16.mxu0 0
      %591 = vmatpush1.bf16.msra.mxu0 0
      %592 = vmatprep.subr.bf16.mxu0 0
      %593 = vmatpush1.bf16.msra.mxu0 0
      %594 = vmatprep.subr.bf16.mxu0 0
      %595 = vmatpush1.bf16.msra.mxu0 0
      %596 = vmatprep.subr.bf16.mxu0 0
      %597 = vmatpush1.bf16.msra.mxu0 0
      %598 = vmatprep.subr.bf16.mxu0 0
      %599 = vmatpush1.bf16.msra.mxu0 0
      %600 = vmatprep.subr.bf16.mxu0 0
      %601 = vmatpush1.bf16.msra.mxu0 0
      %602 = vmatprep.subr.bf16.mxu0 0
      %603 = vmatpush1.bf16.msra.mxu0 0
      %604 = vmatprep.mubr.bf16.mxu0 0
      %605 = vmatmul.mubr.bf16.gmra.mrb[0].mxu0 %v564
      %v606 = vpop.f32.mrb[0].mxu0
      %v607 = vadd.f32 %v561, %v606
      %v608 = vpop.f32.mrb[0].mxu0
      %v609 = vadd.f32 %v561, %v608
      %v610 = vpop.f32.mrb[0].mxu0
      %v611 = vpop.f32.mrb[0].mxu0
      %612 = vdwg.mxu0
      %v615 = vcombine.low %v607, %v609
      %s617 = scalar_lea.vmem %s170, 8
      %618 = vst [vmem:[%s617] sm:$0xff] %v615
      %s619 = scalar_lea.vmem %s165, 16
      %v620 = vld [vmem:[%s619] sm:$0xff]
      %v622 = vcombine.high %v620, %v620
      %v624 = vadd.f32 %v607, %v620
      %v625 = vadd.f32 %v609, %v622
      %626 = vrot.lane.b32.xlu0 %v624, 17
      %v627 = vpop.permute.xlu0 %626
      %628 = vrot.lane.b32.xlu0 %v625, 17
      %v629 = vpop.permute.xlu0 %628
      %v630 = vsel %vm235, %v627, %v629
      %v631 = vsel %vm235, %v629, %v627
      %v632 = vmul.f32 %v631, %v187
      %v633 = vmul.f32 %v630, %v188
      %634 = vst [vmem:[#allocation2] sm:$0xf] %v632
      %635 = vst [vmem:[#allocation2 + $0x8] sm:$0xf] %v633
      %636 = vrot.lane.b32.xlu0 %v624, 16
      %v637 = vpop.permute.xlu0 %636
      %638 = vrot.lane.b32.xlu0 %v625, 16
      %v639 = vpop.permute.xlu0 %638
      %v640 = vsel %vm246, %v637, %v639
      %v641 = vsel %vm246, %v639, %v637
      %v642 = vmul.f32 %v641, %v191
      %v643 = vmul.f32 %v640, %v192
      %v646 = vrot.slane %v642, 4
      %v647 = vrot.slane %v643, 4
      %650 = vst [vmem:[#allocation2] sm:$0xf0] %v646
      %651 = vst [vmem:[#allocation2 + $0x8] sm:$0xf0] %v647
      %652 = vrot.lane.b32.xlu0 %v624, 15
      %v653 = vpop.permute.xlu0 %652
      %654 = vrot.lane.b32.xlu0 %v625, 15
      %v655 = vpop.permute.xlu0 %654
      %v656 = vsel %vm263, %v653, %v655
      %v657 = vsel %vm263, %v655, %v653
      %v658 = vmul.f32 %v657, %v199
      %v659 = vmul.f32 %v656, %v200
      %660 = vst [vmem:[#allocation2 + $0x10] sm:$0xf] %v658
      %661 = vst [vmem:[#allocation2 + $0x18] sm:$0xf] %v659
      %662 = vrot.lane.b32.xlu0 %v624, 1
      %v663 = vpop.permute.xlu0 %662
      %664 = vrot.lane.b32.xlu0 %v625, 1
      %v665 = vpop.permute.xlu0 %664
      %v666 = vsel %vm274, %v663, %v665
      %v667 = vsel %vm274, %v665, %v663
      %v668 = vmul.f32 %v667, %v203
      %v669 = vmul.f32 %v666, %v204
      %v672 = vrot.slane %v668, 4
      %v673 = vrot.slane %v669, 4
      %676 = vst [vmem:[#allocation2 + $0x10] sm:$0xf0] %v672
      %677 = vst [vmem:[#allocation2 + $0x18] sm:$0xf0] %v673
      %678 = vst [vmem:[#allocation2 + $0x20] sm:$0xf] %v624
      %679 = vst [vmem:[#allocation2 + $0x28] sm:$0xf] %v625
      %680 = vrot.lane.b32.xlu0 %v624, 127
      %v681 = vpop.permute.xlu0 %680
      %682 = vrot.lane.b32.xlu0 %v625, 127
      %v683 = vpop.permute.xlu0 %682
      %v684 = vsel %vm293, %v681, %v683
      %v685 = vsel %vm293, %v683, %v681
      %v686 = vmul.f32 %v684, %v207
      %v687 = vmul.f32 %v685, %v208
      %v690 = vrot.slane %v686, 4
      %v691 = vrot.slane %v687, 4
      %694 = vst [vmem:[#allocation2 + $0x20] sm:$0xf0] %v690
      %695 = vst [vmem:[#allocation2 + $0x28] sm:$0xf0] %v691
      %696 = vrot.lane.b32.xlu0 %v624, 113
      %v697 = vpop.permute.xlu0 %696
      %698 = vrot.lane.b32.xlu0 %v625, 113
      %v699 = vpop.permute.xlu0 %698
      %v700 = vsel %vm310, %v697, %v699
      %v701 = vsel %vm310, %v699, %v697
      %v702 = vmul.f32 %v700, %v215
      %v703 = vmul.f32 %v701, %v216
      %704 = vst [vmem:[#allocation2 + $0x30] sm:$0xf] %v702
      %705 = vst [vmem:[#allocation2 + $0x38] sm:$0xf] %v703
      %706 = vrot.lane.b32.xlu0 %v624, 112
      %v707 = vpop.permute.xlu0 %706
      %708 = vrot.lane.b32.xlu0 %v625, 112
      %v709 = vpop.permute.xlu0 %708
      %v710 = vsel %vm321, %v707, %v709
      %v711 = vsel %vm321, %v709, %v707
      %v712 = vmul.f32 %v710, %v219
      %v713 = vmul.f32 %v711, %v220
      %v716 = vrot.slane %v712, 4
      %v717 = vrot.slane %v713, 4
      %720 = vst [vmem:[#allocation2 + $0x30] sm:$0xf0] %v716
      %721 = vst [vmem:[#allocation2 + $0x38] sm:$0xf0] %v717
      %722 = vrot.lane.b32.xlu0 %v624, 111
      %v723 = vpop.permute.xlu0 %722
      %724 = vrot.lane.b32.xlu0 %v625, 111
      %v725 = vpop.permute.xlu0 %724
      %v726 = vsel %vm338, %v723, %v725
      %v727 = vsel %vm338, %v725, %v723
      %v728 = vmul.f32 %v726, %v225
      %v729 = vmul.f32 %v727, %v226
      %730 = vst [vmem:[#allocation2 + $0x40] sm:$0xf] %v728
      %731 = vst [vmem:[#allocation2 + $0x48] sm:$0xf] %v729
      %s732 = scalar_lea.vmem %s1, 4
      %v733 = vld [vmem:[%s732] sm:$0x3]
      %v734 = vld [vmem:[#allocation2] sm:$0xff]
      %v735 = vld [vmem:[#allocation2 + $0x8] sm:$0xff]
      %v736 = vld [vmem:[#allocation2 + $0x10] sm:$0xff]
      %v737 = vld [vmem:[#allocation2 + $0x18] sm:$0xff]
      %v738 = vld [vmem:[#allocation2 + $0x20] sm:$0xff]
      %v739 = vld [vmem:[#allocation2 + $0x28] sm:$0xff]
      %v740 = vld [vmem:[#allocation2 + $0x30] sm:$0xff]
      %v741 = vld [vmem:[#allocation2 + $0x38] sm:$0xff]
      %v742 = vld [vmem:[#allocation2 + $0x40] sm:$0xf]
      %v743 = vld [vmem:[#allocation2 + $0x48] sm:$0xf]
      %v744 = vpack.c.bf16 %v736, %v734
      %v745 = vpack.c.bf16 %v737, %v735
      %v746 = vpack.c.bf16 %v740, %v738
      %v747 = vpack.c.bf16 %v741, %v739
      %v748 = vpack.c.bf16 %v742, %v742
      %v749 = vpack.c.bf16 %v743, %v743
      %s750 = scalar_lea.vmem %s2, 8
      %v751 = vld [vmem:[%s750] sm:$0xf]
      %753 = vset.pattern.permute.xlu0 0
      %754 = vperm.xlu0 %753, %v751
      %v755 = vpop.permute.xlu0 %754
      %v758 = vsel %vm368, %v733, 0
      %v761 = vsel %vm372, %v748, 0
      %v764 = vsel %vm372, %v749, 0
      %766 = vmatprep.subr.bf16.mxu0 %v745
      %767 = vmatpush1.bf16.msra.mxu0 %v744
      %768 = vmatprep.subr.bf16.mxu0 %v747
      %769 = vmatpush1.bf16.msra.mxu0 %v746
      %770 = vmatprep.subr.bf16.mxu0 %v764
      %771 = vmatpush1.bf16.msra.mxu0 %v761
      %772 = vmatprep.subr.bf16.mxu0 0
      %773 = vmatpush1.bf16.msra.mxu0 0
      %774 = vmatprep.subr.bf16.mxu0 0
      %775 = vmatpush1.bf16.msra.mxu0 0
      %776 = vmatprep.subr.bf16.mxu0 0
      %777 = vmatpush1.bf16.msra.mxu0 0
      %778 = vmatprep.subr.bf16.mxu0 0
      %779 = vmatpush1.bf16.msra.mxu0 0
      %780 = vmatprep.subr.bf16.mxu0 0
      %781 = vmatpush1.bf16.msra.mxu0 0
      %782 = vmatprep.subr.bf16.mxu0 0
      %783 = vmatpush1.bf16.msra.mxu0 0
      %784 = vmatprep.subr.bf16.mxu0 0
      %785 = vmatpush1.bf16.msra.mxu0 0
      %786 = vmatprep.subr.bf16.mxu0 0
      %787 = vmatpush1.bf16.msra.mxu0 0
      %788 = vmatprep.subr.bf16.mxu0 0
      %789 = vmatpush1.bf16.msra.mxu0 0
      %790 = vmatprep.subr.bf16.mxu0 0
      %791 = vmatpush1.bf16.msra.mxu0 0
      %792 = vmatprep.subr.bf16.mxu0 0
      %793 = vmatpush1.bf16.msra.mxu0 0
      %794 = vmatprep.subr.bf16.mxu0 0
      %795 = vmatpush1.bf16.msra.mxu0 0
      %796 = vmatprep.subr.bf16.mxu0 0
      %797 = vmatpush1.bf16.msra.mxu0 0
      %798 = vmatprep.mubr.bf16.mxu0 0
      %799 = vmatmul.mubr.bf16.gmra.mrb[0].mxu0 %v758
      %v800 = vpop.f32.mrb[0].mxu0
      %v801 = vadd.f32 %v755, %v800
      %v802 = vpop.f32.mrb[0].mxu0
      %v803 = vadd.f32 %v755, %v802
      %v804 = vpop.f32.mrb[0].mxu0
      %v805 = vpop.f32.mrb[0].mxu0
      %806 = vdwg.mxu0
      %v809 = vcombine.low %v801, %v803
      %s811 = scalar_lea.vmem %s170, 16
      %812 = vst [vmem:[%s811] sm:$0xff] %v809
      %s813 = scalar_lea.vmem %s165, 24
      %v814 = vld [vmem:[%s813] sm:$0xff]
      %s815 = scalar_lea.vmem %s170, 24
      %816 = vst [vmem:[%s815] sm:$0xff] %v814
      %p817 = scmp.lt.s32.totalorder %s14, 1
      %s818 = scalar_select %p817, %s14, 1
      %s819 = smul.addr %s818, 8
      %s820 = smul.addr %s819, 4
      %s821 = scalar_lea.vmem %s3, %s820
      // Predicated region
      $region33: #{scale_conv2d.1} parent=31 // pred_check
        %p822 = pneg %p100
      $region34: #{scale_conv2d.1} parent=31 // pred_check_branch
        %824 = sbr.rel (%p822) target = $region36
      $region35: #{scale_conv2d.1} parent=31 // pred_region
        _
      $region36: #{scale_conv2d.1} parent=31 // pred_fallthru
        _
    $region32: #{scale_conv2d.1} parent=5 // pred_fallthru
      _
    %p825 = scmp.le.s32.totalorder 2, %s9
    // Predicated region
    $region37: #{scale_conv2d.1} parent=5 // pred_check
      %p826 = pneg %p825
    $region38: #{scale_conv2d.1} parent=5 // pred_check_branch
      %828 = sbr.rel (%p826) target = $region40
    $region39: #{scale_conv2d.1} parent=5 // pred_region
      %s829 = ssub.s32 %s9, 2
      // Predicated region
      $region41: #{scale_conv2d.1} parent=39 // pred_check
        %p830 = pneg %p106
      $region42: #{scale_conv2d.1} parent=39 // pred_check_branch
        %832 = sbr.rel (%p830) target = $region44
      $region43: #{scale_conv2d.1} parent=39 // pred_region
        %p833 = scmp.lt.s32.totalorder %s15, 1
        %s834 = scalar_select %p833, %s15, 1
        %s835 = smul.addr %s834, 8
        %s836 = smul.addr %s835, 4
        %s837 = scalar_lea.vmem %s3, %s836
      $region44: #{scale_conv2d.1} parent=39 // pred_fallthru
        _
    $region40: #{scale_conv2d.1} parent=5 // pred_fallthru
      _
  $region6: #{scale_conv2d.1} parent=0 // loop_footer
    %s13 = sadd.s32 1, %s9
  $region7: #{scale_conv2d.1} parent=0 // loop_footer_branch
    %8 = sbr.rel target = $region3
  $region8: #{scale_conv2d.1} parent=0 // loop_exit
    _

</llo_original>
